<compile_context>
chip_gen: v7x
topology: tpu7x:2x2x1
jax: 0.10.0
libtpu: 0.0.40
codegen_flags: <defaults>
</compile_context>

<pallas_src>
import jax
import jax.numpy as jnp
from jax.experimental import pallas as pl
from jax.experimental.pallas import tpu as pltpu


_LANE = 128
_SUBLANE = 8


def _round_up(v, m):
    return ((v + m - 1) // m) * m


def _kernel_split(x_ref, emb_ref, o_ref):
    # x_ref / o_ref: (tile_r, C) tile of one batch element (batch dim squeezed)
    # emb_ref:       (tile_r, C) matching positional-embedding tile
    x = x_ref[...]
    y = x + emb_ref[...]
    o_ref[...] = jnp.where(x == 0, jnp.zeros_like(y), y)


def _kernel_folded(x_ref, emb_ref, o_ref):
    # x_ref / o_ref: (B, tile_r, C); emb_ref: (tile_r, C)
    x = x_ref[...]
    y = x + emb_ref[...][None, :, :]   # leading-dim broadcast: no lane/sublane shuffle
    o_ref[...] = jnp.where(x == 0, jnp.zeros_like(y), y)


def positional_encoder_simple_mask(x, pos_emb_weight):
    """out[b,n,d] = 0 if x[b,n,d]==0 else x[b,n,d] + pos_emb_weight[n,d]."""
    B, N, D = x.shape
    M, Dw = pos_emb_weight.shape
    assert Dw == D and N <= M
    out_dtype = x.dtype  # PyTorch's in-place `x += emb` keeps x's dtype
    itemsize = jnp.dtype(out_dtype).itemsize
    emb_rows = pos_emb_weight[:N].astype(out_dtype)  # tiny table slice/cast

    L = N * D
    pad = 0
    if D % _LANE == 0:
        # Already lane-dense: tile over the sequence axis.
        C, R = D, N
        x3, emb2 = x, emb_rows
    else:
        # Flatten (N, D) -> (R, 128); pad the flattened row if needed so every
        # store is a full-width vst.  Padded x entries are zero -> output zero
        # -> discarded by the final slice.
        C = _LANE
        pad = (-L) % _LANE
        Lp = L + pad
        R = Lp // _LANE
        xf = x.reshape(B, L)
        ef = emb_rows.reshape(L)
        if pad:
            xf = jnp.pad(xf, ((0, 0), (0, pad)))
            ef = jnp.pad(ef, (0, pad))
        x3 = xf.reshape(B, R, C)
        emb2 = ef.reshape(R, C)

    # ---- generation-aware block sizing ----------------------------------
    try:
        vmem_cap = int(pltpu.get_tpu_info().vmem_capacity_bytes)
    except Exception:
        vmem_cap = 64 << 20  # conservative (v7x per-TC)
    target_block = (4 << 20) if vmem_cap >= (64 << 20) else (2 << 20)
    # x + emb + out, each double-buffered ~= 6x block; leave headroom.
    vmem_limit = int(min(vmem_cap // 2, max(32 << 20, 8 * target_block)))

    # Batch-folded fast path when at least 8 folded rows fit in one block.
    folded = (B * _SUBLANE * C * itemsize) <= target_block
    row_bytes = (B if folded else 1) * C * itemsize

    max_rows = max(_SUBLANE, (target_block // row_bytes) // _SUBLANE * _SUBLANE)
    if R > max_rows:
        tile_r = max_rows
    elif R >= 2 * _SUBLANE:
        # Fits in one block, but force >=2 row blocks so both TensorCores on a
        # megacore chip get work (costs only ~0.35 us of per-step overhead).
        tile_r = _round_up(pl.cdiv(R, 2), _SUBLANE)
    else:
        tile_r = R  # single block; equals the full dim (legal without 8-align)
    grid_r = pl.cdiv(R, tile_r)

    cost = pl.CostEstimate(
        flops=2 * B * R * C,  # add + compare/select
        transcendentals=0,
        bytes_accessed=B * R * C * (x3.dtype.itemsize + itemsize)
        + R * C * emb2.dtype.itemsize,
    )

    if folded:
        out3 = pl.pallas_call(
            _kernel_folded,
            out_shape=jax.ShapeDtypeStruct((B, R, C), out_dtype),
            grid_spec=pltpu.PrefetchScalarGridSpec(
                num_scalar_prefetch=0,
                grid=(grid_r,),
                in_specs=[
                    pl.BlockSpec((B, tile_r, C), lambda r: (0, r, 0)),
                    pl.BlockSpec((tile_r, C), lambda r: (r, 0)),
                ],
                out_specs=pl.BlockSpec((B, tile_r, C), lambda r: (0, r, 0)),
            ),
            compiler_params=pltpu.CompilerParams(
                dimension_semantics=("parallel",),
                vmem_limit_bytes=vmem_limit,
            ),
            cost_estimate=cost,
        )(x3, emb2)
    else:
        # Rows parallel (megacore split), batch innermost/arbitrary so the emb
        # tile's block index stays constant and its DMA is skipped on revisits.
        sem = ("parallel", "arbitrary") if grid_r >= 2 else ("parallel", "parallel")
        out3 = pl.pallas_call(
            _kernel_split,
            out_shape=jax.ShapeDtypeStruct((B, R, C), out_dtype),
            grid_spec=pltpu.PrefetchScalarGridSpec(
                num_scalar_prefetch=0,
                grid=(grid_r, B),
                in_specs=[
                    pl.BlockSpec((None, tile_r, C), lambda r, b: (b, r, 0)),
                    pl.BlockSpec((tile_r, C), lambda r, b: (r, 0)),
                ],
                out_specs=pl.BlockSpec((None, tile_r, C), lambda r, b: (b, r, 0)),
            ),
            compiler_params=pltpu.CompilerParams(
                dimension_semantics=sem,
                vmem_limit_bytes=vmem_limit,
            ),
            cost_estimate=cost,
        )(x3, emb2)

    if D % _LANE == 0:
        return out3
    if pad:
        return out3.reshape(B, R * C)[:, :L].reshape(B, N, D)
    return out3.reshape(B, N, D)


def reference(x, pos_emb_weight):
    """Pure-JAX reference replicating the PyTorch forward."""
    B, N, D = x.shape
    emb = pos_emb_weight[:N, :].astype(x.dtype)
    y = x + emb[None, :, :]
    return jnp.where(x == 0, jnp.zeros_like(y), y)


if __name__ == "__main__":
    key = jax.random.PRNGKey(0)

    # Case 1: module-like small shapes (batch=2, seq=8, model_dim=32) ->
    # lane-dense flattened path (N*D = 256 is a multiple of 128).
    B, N, D, MAX_SEQ_LEN = 2, 8, 32, 200
    k1, k2, k3, k4, k5, k6 = jax.random.split(key, 6)
    x = jax.random.normal(k1, (B, N, D), dtype=jnp.float32)
    x = x.at[0, 0, :4].set(0.0)
    x = x.at[1, 3, 10:20].set(0.0)
    w = jax.random.normal(k2, (MAX_SEQ_LEN, D), dtype=jnp.float32)
    out = jax.block_until_ready(positional_encoder_simple_mask(x, w))
    assert out.shape == (B, N, D) and out.dtype == x.dtype
    assert jnp.allclose(out, reference(x, w), atol=1e-6, rtol=1e-6)

    # Case 2: lane-dense model_dim (D=128) -> direct (seq, D) path.
    B2, N2, D2, M2 = 2, 12, 128, 20
    x2 = jax.random.normal(k3, (B2, N2, D2), dtype=jnp.float32)
    x2 = x2.at[1, 5, :7].set(0.0)
    w2 = jax.random.normal(k4, (M2, D2), dtype=jnp.float32)
    out2 = jax.block_until_ready(positional_encoder_simple_mask(x2, w2))
    assert out2.shape == (B2, N2, D2) and out2.dtype == x2.dtype
    assert jnp.allclose(out2, reference(x2, w2), atol=1e-6, rtol=1e-6)

    # Case 3: D=24, N*D=192 not a multiple of 128 -> padded lane-dense path.
    B3, N3, D3, M3 = 2, 8, 24, 50
    x3 = jax.random.normal(k5, (B3, N3, D3), dtype=jnp.float32)
    x3 = x3.at[0, 2, 5:9].set(0.0)
    w3 = jax.random.normal(k6, (M3, D3), dtype=jnp.float32)
    out3 = jax.block_until_ready(positional_encoder_simple_mask(x3, w3))
    assert out3.shape == (B3, N3, D3) and out3.dtype == x3.dtype
    assert jnp.allclose(out3, reference(x3, w3), atol=1e-6, rtol=1e-6)

    print("KERNEL_OK")
</pallas_src>

<mosaic_0001>
module attributes {stable_mosaic.version = 11 : i64} {
  func.func @_kernel_folded(%arg0: i32, %arg1: memref<2x2x128xf32, #tpu.memory_space<vmem>>, %arg2: memref<2x128xf32, #tpu.memory_space<vmem>>, %arg3: memref<2x2x128xf32, #tpu.memory_space<vmem>>) attributes {dimension_semantics = [#tpu.dimension_semantics<parallel>], iteration_bounds = array<i64: 1>, scalar_prefetch = 0 : i64, scratch_operands = 0 : i64, tpu.core_type = #tpu.core_type<tc>, window_params = [{transform_indices = @transform_0, window_bounds = array<i64: 2, 2, 128>}, {transform_indices = @transform_1, window_bounds = array<i64: 2, 128>}, {transform_indices = @transform_2, window_bounds = array<i64: 2, 2, 128>}]} {
    %c0 = arith.constant 0 : index
    %c0_0 = arith.constant 0 : index
    %c0_1 = arith.constant 0 : index
    %0 = vector.load %arg1[%c0, %c0_0, %c0_1] : memref<2x2x128xf32, #tpu.memory_space<vmem>>, vector<2x2x128xf32>
    %c0_2 = arith.constant 0 : index
    %c0_3 = arith.constant 0 : index
    %1 = vector.load %arg2[%c0_2, %c0_3] : memref<2x128xf32, #tpu.memory_space<vmem>>, vector<2x128xf32>
    %2 = vector.shape_cast %1 : vector<2x128xf32> to vector<1x2x128xf32>
    %3 = vector.broadcast %2 : vector<1x2x128xf32> to vector<2x2x128xf32>
    %4 = arith.addf %0, %3 : vector<2x2x128xf32>
    %cst = arith.constant 0.000000e+00 : f32
    %5 = vector.broadcast %cst : f32 to vector<2x2x128xf32>
    %6 = arith.cmpf oeq, %0, %5 : vector<2x2x128xf32>
    %cst_4 = arith.constant 0.000000e+00 : f32
    %7 = vector.broadcast %cst_4 : f32 to vector<2x2x128xf32>
    %8 = arith.select %6, %7, %4 : vector<2x2x128xi1>, vector<2x2x128xf32>
    %c0_5 = arith.constant 0 : index
    %c0_6 = arith.constant 0 : index
    %c0_7 = arith.constant 0 : index
    %9 = vector.load %arg3[%c0_5, %c0_6, %c0_7] : memref<2x2x128xf32, #tpu.memory_space<vmem>>, vector<2x2x128xf32>
    tpu.vector_store %arg3[%c0_5, %c0_6, %c0_7], %8 {strides = array<i32>} : memref<2x2x128xf32, #tpu.memory_space<vmem>>, vector<2x2x128xf32>,
    return
  }
  func.func @transform_0(%arg0: i32) -> (i32, i32, i32) {
    %c0_i32 = arith.constant 0 : i32
    %c0_i32_0 = arith.constant 0 : i32
    %c0_i32_1 = arith.constant 0 : i32
    return %c0_i32, %arg0, %c0_i32_0 : i32, i32, i32
  }
  func.func @transform_1(%arg0: i32) -> (i32, i32) {
    %c0_i32 = arith.constant 0 : i32
    %c0_i32_0 = arith.constant 0 : i32
    return %arg0, %c0_i32 : i32, i32
  }
  func.func @transform_2(%arg0: i32) -> (i32, i32, i32) {
    %c0_i32 = arith.constant 0 : i32
    %c0_i32_0 = arith.constant 0 : i32
    %c0_i32_1 = arith.constant 0 : i32
    return %c0_i32, %arg0, %c0_i32_0 : i32, i32, i32
  }
}

</mosaic_0001>

<llo_original>
// kernel: tpu_custom_call.1
$region0: #{tpu_custom_call.1}
  #allocation0 [shape = 'u32[]', space=smem, size = 0x4, offset = 0x4, fixed_abs, tag = 'smem constant byte address 0x4 - core index']
  #allocation1 [shape = 'u32[144,128]{1,0:T(1,128)}', space=vmem, size = 0x12000, scoped, tag = 'internal scratch']
  %s0 = inlined_call_operand.hbm [shape: f32[2,2,128], index: 0, kind: input, shape index: {}]
  %s1 = inlined_call_operand.vmem [shape: f32[2,128], index: 1, kind: input, shape index: {}]
  %s2 = inlined_call_operand.hbm [shape: f32[2,2,128], index: 2, kind: output, shape index: {}]
  %s3 = sld [smem:[#allocation0]]
  $region22: #{tpu_custom_call.1} parent=0
    _
  %s5 = ssub.s32 1, %s3
  %s6 = scalar_select 0, %s5, %s3
  $region1: #{tpu_custom_call.1} parent=0
    #allocation2 [shape = 'u8[2048]{0}', space=vmem, size = 0x800, scoped, tag = 'input window, operand 0, single buffered']
    #allocation3 [shape = 's32[1]{0}', space=sflag, size = 0x4, scoped, tag = 'scoped memory for tpu_custom_call.1']
    #allocation4 [shape = 's32[1]{0}', space=sflag, size = 0x4, scoped, tag = 'scoped memory for tpu_custom_call.1']
    #allocation5 [shape = 'u8[2048]{0}', space=vmem, size = 0x800, scoped, tag = 'output window, operand 0, single buffered']
    %7 = vsyncpa [#allocation3], 0
    %8 = vsyncpa [#allocation4], 0
    // Predicated region
    $region2: #{tpu_custom_call.1} parent=1 // pred_check
      _
    $region3: #{tpu_custom_call.1} parent=1 // pred_check_branch
      %10 = sbr.rel (0) target = $region5
    $region4: #{tpu_custom_call.1} parent=1 // pred_region
      %s12 = ssub.s32 64, 64
      %13 = vsyncadd [#allocation3], %s12
      %s14 = sshll.u32 [#allocation2], 4
      %s15 = int_to_ptr.vmem [resolvable:$true] %s14
      %20 = dma.hbm_to_vmem [thread:$0]  %s0, 64, %s15, [#allocation3], 32, 32, 2
    $region5: #{tpu_custom_call.1} parent=1 // pred_fallthru
      _
    // Predicated region
    $region6: #{tpu_custom_call.1} parent=1 // pred_check
      _
    $region7: #{tpu_custom_call.1} parent=1 // pred_check_branch
      %22 = sbr.rel (0) target = $region9
    $region8: #{tpu_custom_call.1} parent=1 // pred_region
      _
    $region9: #{tpu_custom_call.1} parent=1 // pred_fallthru
      _
    // Predicated region
    $region10: #{tpu_custom_call.1} parent=1 // pred_check
      _
    $region11: #{tpu_custom_call.1} parent=1 // pred_check_branch
      %24 = sbr.rel (0) target = $region13
    $region12: #{tpu_custom_call.1} parent=1 // pred_region
      %25 = dma.done [#allocation3], 64
    $region13: #{tpu_custom_call.1} parent=1 // pred_fallthru
      _
    %v26 = vld [vmem:[#allocation2] sm:$0x3]
    %v27 = vld [vmem:[#allocation2 + $0x2] sm:$0x3]
    %v28 = vld [vmem:[%s1] sm:$0x3]
    %v29 = vadd.f32 %v26, %v28
    %v30 = vadd.f32 %v27, %v28
    %vm31 = vcmp.eq.f32.partialorder %v26, 0.0
    %vm32 = vcmp.eq.f32.partialorder %v27, 0.0
    %v33 = vsel %vm31, 0.0, %v29
    %v34 = vsel %vm32, 0.0, %v30
    %35 = vst [vmem:[#allocation5] sm:$0x3] %v33
    %36 = vst [vmem:[#allocation5 + $0x2] sm:$0x3] %v34
    // Predicated region
    $region14: #{tpu_custom_call.1} parent=1 // pred_check
      _
    $region15: #{tpu_custom_call.1} parent=1 // pred_check_branch
      %38 = sbr.rel (0) target = $region17
    $region16: #{tpu_custom_call.1} parent=1 // pred_region
      %s40 = ssub.s32 64, 64
      %41 = vsyncadd [#allocation4], %s40
      %s42 = sshll.u32 [#allocation5], 4
      %s43 = int_to_ptr.vmem [resolvable:$true] %s42
      %48 = dma.vmem_to_hbm [thread:$0]  %s43, 64, %s2, [#allocation4], 32, 32, 2
    $region17: #{tpu_custom_call.1} parent=1 // pred_fallthru
      _
    // Predicated region
    $region18: #{tpu_custom_call.1} parent=1 // pred_check
      _
    $region19: #{tpu_custom_call.1} parent=1 // pred_check_branch
      %50 = sbr.rel (0) target = $region21
    $region20: #{tpu_custom_call.1} parent=1 // pred_region
      %51 = dma.done [#allocation4], 64
    $region21: #{tpu_custom_call.1} parent=1 // pred_fallthru
      _
    %52 = vsyncpa [#allocation3], 1
    %53 = vsyncpa [#allocation4], 1

</llo_original>
